<compile_context>
chip_gen: v7x
topology: tpu7x:2x2x1
jax: 0.10.0
libtpu: 0.0.40
codegen_flags: <defaults>
</compile_context>

<pallas_src>
import jax
import jax.numpy as jnp
from jax.experimental import pallas as pl
from jax.experimental.pallas import tpu as pltpu

_SQRT2 = 1.4142135623730951


# ----------------------------- Haar (db1) DWT glue ---------------------------
def haar_wavedec(x, level=3):
  """x: (..., N) with N divisible by 2**level. Returns [cA_L, cD_L, ..., cD_1]."""
  coeffs = []
  a = x
  for _ in range(level):
    even, odd = a[..., 0::2], a[..., 1::2]
    d = (even - odd) / _SQRT2
    a = (even + odd) / _SQRT2
    coeffs.append(d)
  return [a] + coeffs[::-1]


def haar_waverec(coeffs):
  """coeffs: [cA_L, cD_L, ..., cD_1] (same leading dims). Returns signal."""
  a = coeffs[0]
  for d in coeffs[1:]:
    even = (a + d) / _SQRT2
    odd = (a - d) / _SQRT2
    a = jnp.stack([even, odd], axis=-1).reshape(a.shape[:-1] + (2 * a.shape[-1],))
  return a


def _haar_synthesis_matrix(n, band_lengths):
  """(n, n) matrix W with row k = waverec of the k-th unit coefficient vector.

  Because the IDWT is linear, waverec(flat_coeffs) == flat_coeffs @ W.
  """
  eye = jnp.eye(n, dtype=jnp.float32)
  parts, off = [], 0
  for length in band_lengths:
    parts.append(eye[:, off:off + length])
    off += length
  return haar_waverec(parts)


# ------------------------------- Pallas kernel --------------------------------
def _freq_prompt_kernel(coeff_ref, scale_ref, gate_ref, w_ref, out_ref):
  """One grid step = one batch element; masking + full Haar reconstruction.

  coeff_ref: (1, 1, N)  -- this batch element's flat wavelet coefficients
  scale_ref: (C, N)     -- per-(channel, position) prompt row-sums (0 for cA)
  gate_ref : (C, N)     -- 1.0 where the sigmoid mask applies, 0.0 for cA
  w_ref    : (N, N)     -- Haar synthesis matrix (IDWT as a matmul)
  out_ref  : (1, C, N)  -- reconstructed, masked, channel-expanded signal
  """
  coeff = coeff_ref[0]                                     # (1, N)
  scale = scale_ref[...]                                   # (C, N)
  gate = gate_ref[...]                                     # (C, N)
  # Hoist the broadcast once (JAX does not CSE broadcast_in_dim).
  coeff_b = jnp.broadcast_to(coeff, scale.shape)           # (C, N)
  # Rank-1 rewrite of `sigmoid(prompt @ expand(coeff))`: EUP sigmoid + VPU mul.
  sig = jax.nn.sigmoid(scale * coeff_b)                    # (C, N)
  factor = gate * sig + (1.0 - gate)                       # cA passes through
  masked = factor * coeff_b                                # (C, N)
  # Inverse DWT fused in-kernel: (C, N) @ (N, N) on the MXU; masked coeffs
  # never leave VMEM, output is written to HBM exactly once, lane-dense in N.
  out = jnp.dot(masked, w_ref[...], preferred_element_type=jnp.float32)
  out_ref[...] = out[None].astype(out_ref.dtype)


# ------------------------------ Module forward --------------------------------
def frequency_prompt_forward(featuremap, prompt, *, level=3):
  """featuremap: (B, N); prompt: (num_bands, P, C). Returns (B, C, N)."""
  orig_dtype = featuremap.dtype
  x = featuremap.astype(jnp.float32)
  B, N = x.shape
  num_bands, P, C = prompt.shape
  assert num_bands == level + 1, "num_bands must equal level + 1"
  assert P == C, ("PyTorch broadcast `mask * frequency_pixel` needs "
                  "num_prompts == num_channels")
  assert N % (2 ** level) == 0, "signal length must be divisible by 2**level"

  coeffs = haar_wavedec(x, level=level)                    # [(B, L_k)]
  lens = [c.shape[-1] for c in coeffs]                     # [N/8, N/8, N/4, N/2]
  flat = jnp.concatenate(coeffs, axis=-1).reshape(B, 1, N)  # (B, 1, N)

  # Because expand() makes every channel row of frequency_pixel identical,
  # prompt[band] @ freq == prompt[band].sum(-1)[:, None] * coeff  (rank-1).
  row_sums = prompt.astype(jnp.float32).sum(axis=-1)       # (num_bands, P)
  scale_parts = [jnp.zeros((C, lens[0]), jnp.float32)]     # cA: unused scale
  gate_parts = [jnp.zeros((C, lens[0]), jnp.float32)]      # cA: pass-through
  for k in range(1, num_bands):
    scale_parts.append(jnp.broadcast_to(row_sums[k][:, None], (C, lens[k])))
    gate_parts.append(jnp.ones((C, lens[k]), jnp.float32))
  scale = jnp.concatenate(scale_parts, axis=-1)            # (C, N)
  gate = jnp.concatenate(gate_parts, axis=-1)              # (C, N)

  w = _haar_synthesis_matrix(N, lens)                      # (N, N)

  out = pl.pallas_call(
      _freq_prompt_kernel,
      out_shape=jax.ShapeDtypeStruct((B, C, N), jnp.float32),
      grid=(B,),
      in_specs=[
          pl.BlockSpec((1, 1, N), lambda b: (b, 0, 0)),
          pl.BlockSpec((C, N), lambda b: (0, 0)),
          pl.BlockSpec((C, N), lambda b: (0, 0)),
          pl.BlockSpec((N, N), lambda b: (0, 0)),
      ],
      out_specs=pl.BlockSpec((1, C, N), lambda b: (b, 0, 0)),
      compiler_params=pltpu.CompilerParams(
          # Independent batch steps -> shard across v7x's 2 TensorCores.
          dimension_semantics=("parallel",),
          vmem_limit_bytes=32 * 1024 * 1024,
      ),
  )(flat, scale, gate, w)
  return out.astype(orig_dtype)


# Pure-JAX reference of the module semantics (matmul form + explicit waverec).
def _forward_ref(featuremap, prompt, *, level=3):
  x = featuremap.astype(jnp.float32)
  B, N = x.shape
  num_bands, P, C = prompt.shape
  coeffs = haar_wavedec(x, level=level)
  masked = [jnp.broadcast_to(coeffs[0][:, None, :], (B, C, coeffs[0].shape[-1]))]
  for k in range(1, num_bands):
    coeff = coeffs[k]
    L = coeff.shape[-1]
    freq = jnp.broadcast_to(coeff[:, None, :], (B, C, L))
    m = jnp.einsum("pc,bcl->bpl", prompt[k].astype(jnp.float32), freq,
                   precision=jax.lax.Precision.HIGHEST)
    masked.append(jax.nn.sigmoid(m) * freq)
  return haar_waverec(masked)


if __name__ == "__main__":
  # Small shapes consistent with the module: batch=2, signal length=64,
  # num_channels = num_prompts = 8, level-3 db1 -> num_bands = 4.
  B, N = 2, 64
  num_channels = 8
  num_prompts = 8
  num_bands = 4

  key = jax.random.PRNGKey(0)
  k_x, k_p = jax.random.split(key)
  featuremap = jax.random.normal(k_x, (B, N), dtype=jnp.float32)
  # nn.Parameter(torch.randn(num_bands, num_prompts, num_channels))
  prompt = jax.random.normal(
      k_p, (num_bands, num_prompts, num_channels), dtype=jnp.float32)

  out = frequency_prompt_forward(featuremap, prompt)
  out = jax.block_until_ready(out)
  assert out.shape == (B, num_channels, N), out.shape

  # Sanity check against the pure-JAX reference (tolerance allows for MXU
  # f32 pass emulation in the in-kernel IDWT matmul).
  ref = jax.block_until_ready(_forward_ref(featuremap, prompt))
  assert jnp.allclose(out, ref, atol=5e-3, rtol=5e-3), (
      float(jnp.max(jnp.abs(out - ref))))

  print("KERNEL_OK")
</pallas_src>

<mosaic_0001>
module attributes {stable_mosaic.version = 11 : i64} {
  func.func @_freq_prompt_kernel(%arg0: i32, %arg1: memref<1x1x64xf32, #tpu.memory_space<vmem>>, %arg2: memref<8x64xf32, #tpu.memory_space<vmem>>, %arg3: memref<8x64xf32, #tpu.memory_space<vmem>>, %arg4: memref<64x64xf32, #tpu.memory_space<vmem>>, %arg5: memref<1x8x64xf32, #tpu.memory_space<vmem>>) attributes {dimension_semantics = [#tpu.dimension_semantics<parallel>], iteration_bounds = array<i64: 2>, scalar_prefetch = 0 : i64, scratch_operands = 0 : i64, tpu.core_type = #tpu.core_type<tc>, window_params = [{transform_indices = @transform_0, window_bounds = array<i64: 1, 1, 64>}, {pipeline_mode = #tpu.pipeline_mode<synchronous>, transform_indices = @transform_1, window_bounds = array<i64: 8, 64>}, {pipeline_mode = #tpu.pipeline_mode<synchronous>, transform_indices = @transform_2, window_bounds = array<i64: 8, 64>}, {pipeline_mode = #tpu.pipeline_mode<synchronous>, transform_indices = @transform_3, window_bounds = array<i64: 64, 64>}, {transform_indices = @transform_4, window_bounds = array<i64: 1, 8, 64>}]} {
    %c0 = arith.constant 0 : index
    %c0_0 = arith.constant 0 : index
    %c0_1 = arith.constant 0 : index
    %0 = vector.load %arg1[%c0, %c0_0, %c0_1] : memref<1x1x64xf32, #tpu.memory_space<vmem>>, vector<1x1x64xf32>
    %1 = vector.shape_cast %0 : vector<1x1x64xf32> to vector<1x64xf32>
    %c0_2 = arith.constant 0 : index
    %c0_3 = arith.constant 0 : index
    %2 = vector.load %arg2[%c0_2, %c0_3] : memref<8x64xf32, #tpu.memory_space<vmem>>, vector<8x64xf32>
    %c0_4 = arith.constant 0 : index
    %c0_5 = arith.constant 0 : index
    %3 = vector.load %arg3[%c0_4, %c0_5] : memref<8x64xf32, #tpu.memory_space<vmem>>, vector<8x64xf32>
    %4 = vector.shape_cast %1 : vector<1x64xf32> to vector<1x64xf32>
    %5 = vector.broadcast %4 : vector<1x64xf32> to vector<8x64xf32>
    %6 = arith.mulf %2, %5 : vector<8x64xf32>
    %7 = arith.negf %6 : vector<8x64xf32>
    %8 = math.exp %7 : vector<8x64xf32>
    %cst = arith.constant 1.000000e+00 : f32
    %9 = vector.broadcast %cst : f32 to vector<8x64xf32>
    %10 = arith.addf %9, %8 : vector<8x64xf32>
    %11 = arith.divf %9, %10 : vector<8x64xf32>
    %12 = arith.mulf %3, %11 : vector<8x64xf32>
    %cst_6 = arith.constant 1.000000e+00 : f32
    %13 = vector.broadcast %cst_6 : f32 to vector<8x64xf32>
    %14 = arith.subf %13, %3 : vector<8x64xf32>
    %15 = arith.addf %12, %14 : vector<8x64xf32>
    %16 = arith.mulf %15, %5 : vector<8x64xf32>
    %c0_7 = arith.constant 0 : index
    %c0_8 = arith.constant 0 : index
    %17 = vector.load %arg4[%c0_7, %c0_8] : memref<64x64xf32, #tpu.memory_space<vmem>>, vector<64x64xf32>
    %cst_9 = arith.constant dense<0.000000e+00> : vector<8x64xf32>
    %18 = tpu.matmul %16, %17, %cst_9 {dimension_numbers = #tpu.dot_dimension_numbers<[1], [0], [0], [1], [0, 0, 1, 1], [], []>} : vector<8x64xf32>, vector<64x64xf32>, vector<8x64xf32> -> vector<8x64xf32>
    %19 = vector.shape_cast %18 : vector<8x64xf32> to vector<1x8x64xf32>
    %c0_10 = arith.constant 0 : index
    %c0_11 = arith.constant 0 : index
    %c0_12 = arith.constant 0 : index
    %20 = vector.load %arg5[%c0_10, %c0_11, %c0_12] : memref<1x8x64xf32, #tpu.memory_space<vmem>>, vector<1x8x64xf32>
    tpu.vector_store %arg5[%c0_10, %c0_11, %c0_12], %19 {strides = array<i32>} : memref<1x8x64xf32, #tpu.memory_space<vmem>>, vector<1x8x64xf32>,
    return
  }
  func.func @transform_0(%arg0: i32) -> (i32, i32, i32) {
    %c0_i32 = arith.constant 0 : i32
    %c0_i32_0 = arith.constant 0 : i32
    %c0_i32_1 = arith.constant 0 : i32
    return %arg0, %c0_i32, %c0_i32_0 : i32, i32, i32
  }
  func.func @transform_1(%arg0: i32) -> (i32, i32) {
    %c0_i32 = arith.constant 0 : i32
    %c0_i32_0 = arith.constant 0 : i32
    %c0_i32_1 = arith.constant 0 : i32
    return %c0_i32, %c0_i32_0 : i32, i32
  }
  func.func @transform_2(%arg0: i32) -> (i32, i32) {
    %c0_i32 = arith.constant 0 : i32
    %c0_i32_0 = arith.constant 0 : i32
    %c0_i32_1 = arith.constant 0 : i32
    return %c0_i32, %c0_i32_0 : i32, i32
  }
  func.func @transform_3(%arg0: i32) -> (i32, i32) {
    %c0_i32 = arith.constant 0 : i32
    %c0_i32_0 = arith.constant 0 : i32
    %c0_i32_1 = arith.constant 0 : i32
    return %c0_i32, %c0_i32_0 : i32, i32
  }
  func.func @transform_4(%arg0: i32) -> (i32, i32, i32) {
    %c0_i32 = arith.constant 0 : i32
    %c0_i32_0 = arith.constant 0 : i32
    %c0_i32_1 = arith.constant 0 : i32
    return %arg0, %c0_i32, %c0_i32_0 : i32, i32, i32
  }
}

</mosaic_0001>

<llo_original>
// kernel: tpu_custom_call.1
$region0: #{tpu_custom_call.1}
  #allocation0 [shape = 'u32[]', space=smem, size = 0x4, offset = 0x4, fixed_abs, tag = 'smem constant byte address 0x4 - core index']
  #allocation1 [shape = 'u32[144,128]{1,0:T(1,128)}', space=vmem, size = 0x12000, scoped, tag = 'internal scratch']
  %s0 = inlined_call_operand.hbm [shape: f32[2,1,64], index: 0, kind: input, shape index: {}]
  %s1 = inlined_call_operand.hbm [shape: f32[8,64], index: 1, kind: input, shape index: {}]
  %s2 = inlined_call_operand.hbm [shape: f32[8,64], index: 2, kind: input, shape index: {}]
  %s3 = inlined_call_operand.hbm [shape: f32[64,64], index: 3, kind: input, shape index: {}]
  %s4 = inlined_call_operand.hbm [shape: f32[2,8,64], index: 4, kind: output, shape index: {}]
  %s5 = sld [smem:[#allocation0]]
  $region65: #{tpu_custom_call.1} parent=0
    _
  %s7 = ssub.s32 1, %s5
  %s8 = scalar_select 0, %s7, %s5
  $region1: #{tpu_custom_call.1} parent=0
    #allocation2 [shape = 'u8[1024]{0}', space=vmem, size = 0x400, scoped, tag = 'input window, operand 0']
    #allocation3 [shape = 's32[2]{0}', space=sflag, size = 0x8, scoped, tag = 'scoped memory for tpu_custom_call.1']
    #allocation4 [shape = 's32[2]{0}', space=sflag, size = 0x8, scoped, tag = 'scoped memory for tpu_custom_call.1']
    #allocation5 [shape = 'u8[4096]{0}', space=vmem, size = 0x1000, scoped, tag = 'input window, operand 1, single buffered']
    #allocation6 [shape = 's32[1]{0}', space=sflag, size = 0x4, scoped, tag = 'scoped memory for tpu_custom_call.1']
    #allocation7 [shape = 'u8[4096]{0}', space=vmem, size = 0x1000, scoped, tag = 'input window, operand 2, single buffered']
    #allocation8 [shape = 'u8[32768]{0}', space=vmem, size = 0x8000, scoped, tag = 'input window, operand 3, single buffered']
    #allocation9 [shape = 's32[1]{0}', space=sflag, size = 0x4, scoped, tag = 'scoped memory for tpu_custom_call.1']
    #allocation10 [shape = 'u8[8192]{0}', space=vmem, size = 0x2000, scoped, tag = 'output window, operand 0']
    %9 = vsyncpa [#allocation3], 0
    %s10 = scalar_lea.sflag [#allocation3], 1
    %11 = vsyncpa %s10, 0
    %12 = vsyncpa [#allocation6], 0
    %13 = vsyncpa [#allocation9], 0
    %14 = vsyncpa [#allocation4], 0
    %s15 = scalar_lea.sflag [#allocation4], 1
    %16 = vsyncpa %s15, 0
    loop: start=0, step=1, limit=4
    $region2: #{tpu_custom_call.1} parent=1 // loop_pre_header
      _
    $region3: #{tpu_custom_call.1} parent=1 // loop_header
      %s18 = sphi 0, %s22
      %p19 = scmp.ge.s32.totalorder %s18, 4
      %s28 = sphi 0, %s30
      %s31 = sphi 0, %s28
      %s32 = sphi 0, %s31
      %s48 = sphi 0, %s32
      %s52 = sphi 0, %s52
      %s54 = sphi 0, %s52
      %s55 = sphi 0, %s54
      %s69 = sphi 0, %s55
      %s73 = sphi 0, %s73
      %s75 = sphi 0, %s73
      %s76 = sphi 0, %s75
      %s90 = sphi 0, %s76
      %s94 = sphi 0, %s94
      %s96 = sphi 0, %s94
      %s97 = sphi 0, %s96
      %s111 = sphi 0, %s97
      %s117 = sphi 0, %s119
      %s120 = sphi 0, %s117
      %s121 = sphi 0, %s120
      %s137 = sphi 0, %s121
    $region4: #{tpu_custom_call.1} parent=1 // loop_header_branch
      %21 = sbr.rel (%p19) target = $region8
    $region5: #{tpu_custom_call.1} parent=1 // loop_body
      %s23 = ssub.s32 %s18, 1
      %s24 = ssub.s32 %s18, 2
      %s25 = sadd.s32 %s18, 1
      %s26 = ssub.s32 %s18, %s25
      %p27 = scmp.eq.s32.totalorder %s26, 0
      %s29 = sadd.s32 %s28, 1
      %s30 = scalar_select %p27, %s28, %s29
      %p33 = pneg %p27
      %p34 = scmp.eq.s32.totalorder %s18, 1
      %p35 = por %p33, %p34
      %p36 = scmp.ne.s32.totalorder %s28, %s31
      %p37 = scmp.eq.s32.totalorder %s18, 0
      %p38 = por %p36, %p37
      %p39 = scmp.ne.s32.totalorder %s28, %s31
      %p40 = scmp.eq.s32.totalorder %s23, 1
      %p41 = por %p39, %p40
      %p42 = scmp.ne.s32.totalorder %s31, %s32
      %p43 = scmp.eq.s32.totalorder %s23, 0
      %p44 = por %p42, %p43
      %p45 = scmp.ne.s32.totalorder %s31, %s32
      %p46 = scmp.eq.s32.totalorder %s24, 1
      %p47 = por %p45, %p46
      %p49 = scmp.ne.s32.totalorder %s32, %s48
      %p50 = scmp.eq.s32.totalorder %s24, 0
      %p51 = por %p49, %p50
      %s53 = sadd.s32 %s52, 1
      %p56 = scmp.eq.s32.totalorder %s18, 1
      %p57 = scmp.ne.s32.totalorder %s52, %s54
      %p58 = scmp.eq.s32.totalorder %s18, 0
      %p59 = por %p57, %p58
      %p60 = scmp.ne.s32.totalorder %s52, %s54
      %p61 = scmp.eq.s32.totalorder %s23, 1
      %p62 = por %p60, %p61
      %p63 = scmp.ne.s32.totalorder %s54, %s55
      %p64 = scmp.eq.s32.totalorder %s23, 0
      %p65 = por %p63, %p64
      %p66 = scmp.ne.s32.totalorder %s54, %s55
      %p67 = scmp.eq.s32.totalorder %s24, 1
      %p68 = por %p66, %p67
      %p70 = scmp.ne.s32.totalorder %s55, %s69
      %p71 = scmp.eq.s32.totalorder %s24, 0
      %p72 = por %p70, %p71
      %s74 = sadd.s32 %s73, 1
      %p77 = scmp.eq.s32.totalorder %s18, 1
      %p78 = scmp.ne.s32.totalorder %s73, %s75
      %p79 = scmp.eq.s32.totalorder %s18, 0
      %p80 = por %p78, %p79
      %p81 = scmp.ne.s32.totalorder %s73, %s75
      %p82 = scmp.eq.s32.totalorder %s23, 1
      %p83 = por %p81, %p82
      %p84 = scmp.ne.s32.totalorder %s75, %s76
      %p85 = scmp.eq.s32.totalorder %s23, 0
      %p86 = por %p84, %p85
      %p87 = scmp.ne.s32.totalorder %s75, %s76
      %p88 = scmp.eq.s32.totalorder %s24, 1
      %p89 = por %p87, %p88
      %p91 = scmp.ne.s32.totalorder %s76, %s90
      %p92 = scmp.eq.s32.totalorder %s24, 0
      %p93 = por %p91, %p92
      %s95 = sadd.s32 %s94, 1
      %p98 = scmp.eq.s32.totalorder %s18, 1
      %p99 = scmp.ne.s32.totalorder %s94, %s96
      %p100 = scmp.eq.s32.totalorder %s18, 0
      %p101 = por %p99, %p100
      %p102 = scmp.ne.s32.totalorder %s94, %s96
      %p103 = scmp.eq.s32.totalorder %s23, 1
      %p104 = por %p102, %p103
      %p105 = scmp.ne.s32.totalorder %s96, %s97
      %p106 = scmp.eq.s32.totalorder %s23, 0
      %p107 = por %p105, %p106
      %p108 = scmp.ne.s32.totalorder %s96, %s97
      %p109 = scmp.eq.s32.totalorder %s24, 1
      %p110 = por %p108, %p109
      %p112 = scmp.ne.s32.totalorder %s97, %s111
      %p113 = scmp.eq.s32.totalorder %s24, 0
      %p114 = por %p112, %p113
      %s115 = ssub.s32 %s18, %s25
      %p116 = scmp.eq.s32.totalorder %s115, 0
      %s118 = sadd.s32 %s117, 1
      %s119 = scalar_select %p116, %s117, %s118
      %p122 = pneg %p116
      %p123 = scmp.eq.s32.totalorder %s18, 1
      %p124 = por %p122, %p123
      %p125 = scmp.ne.s32.totalorder %s117, %s120
      %p126 = scmp.eq.s32.totalorder %s18, 0
      %p127 = por %p125, %p126
      %p128 = scmp.ne.s32.totalorder %s117, %s120
      %p129 = scmp.eq.s32.totalorder %s23, 1
      %p130 = por %p128, %p129
      %p131 = scmp.ne.s32.totalorder %s120, %s121
      %p132 = scmp.eq.s32.totalorder %s23, 0
      %p133 = por %p131, %p132
      %p134 = scmp.ne.s32.totalorder %s120, %s121
      %p135 = scmp.eq.s32.totalorder %s24, 1
      %p136 = por %p134, %p135
      %p138 = scmp.ne.s32.totalorder %s121, %s137
      %p139 = scmp.eq.s32.totalorder %s24, 0
      %p140 = por %p138, %p139
      %p141 = scmp.le.s32.totalorder 1, %s18
      %p142 = scmp.lt.s32.totalorder %s18, 3
      %p143 = pnand %p141, %p142
      %p144 = pneg %p143
      // Predicated region
      $region9: #{tpu_custom_call.1} parent=5 // pred_check
        _
      $region10: #{tpu_custom_call.1} parent=5 // pred_check_branch
        %146 = sbr.rel (%p143) target = $region12
      $region11: #{tpu_custom_call.1} parent=5 // pred_region
        %s147 = ssub.s32 %s18, 1
        // Predicated region
        $region13: #{tpu_custom_call.1} parent=11 // pred_check
          %p148 = pneg %p65
        $region14: #{tpu_custom_call.1} parent=11 // pred_check_branch
          %150 = sbr.rel (%p148) target = $region16
        $region15: #{tpu_custom_call.1} parent=11 // pred_region
          %s152 = ssub.s32 128, 128
          %153 = vsyncadd [#allocation6], %s152
          %s155 = sshll.u32 [#allocation5], 4
          %s156 = int_to_ptr.vmem [resolvable:$true] %s155
          %158 = dma.hbm_to_vmem [thread:$0]  %s1, 128, %s156, [#allocation6]
        $region16: #{tpu_custom_call.1} parent=11 // pred_fallthru
          _
        // Predicated region
        $region17: #{tpu_custom_call.1} parent=11 // pred_check
          %p159 = pneg %p86
        $region18: #{tpu_custom_call.1} parent=11 // pred_check_branch
          %161 = sbr.rel (%p159) target = $region20
        $region19: #{tpu_custom_call.1} parent=11 // pred_region
          %s163 = ssub.s32 128, 128
          %164 = vsyncadd [#allocation6], %s163
          %s166 = sshll.u32 [#allocation7], 4
          %s167 = int_to_ptr.vmem [resolvable:$true] %s166
          %169 = dma.hbm_to_vmem [thread:$0]  %s2, 128, %s167, [#allocation6]
        $region20: #{tpu_custom_call.1} parent=11 // pred_fallthru
          _
        // Predicated region
        $region21: #{tpu_custom_call.1} parent=11 // pred_check
          %p170 = pneg %p107
        $region22: #{tpu_custom_call.1} parent=11 // pred_check_branch
          %172 = sbr.rel (%p170) target = $region24
        $region23: #{tpu_custom_call.1} parent=11 // pred_region
          %s174 = ssub.s32 1024, 1024
          %175 = vsyncadd [#allocation9], %s174
          %s176 = sshll.u32 [#allocation8], 4
          %s177 = int_to_ptr.vmem [resolvable:$true] %s176
          %182 = dma.hbm_to_vmem [thread:$0]  %s3, 1024, %s177, [#allocation9], 128, 128, 8
        $region24: #{tpu_custom_call.1} parent=11 // pred_fallthru
          _
      $region12: #{tpu_custom_call.1} parent=5 // pred_fallthru
        _
      %p183 = scmp.lt.s32.totalorder %s18, 2
      // Predicated region
      $region25: #{tpu_custom_call.1} parent=5 // pred_check
        %p184 = pneg %p183
      $region26: #{tpu_custom_call.1} parent=5 // pred_check_branch
        %186 = sbr.rel (%p184) target = $region28
      $region27: #{tpu_custom_call.1} parent=5 // pred_region
        // Predicated region
        $region29: #{tpu_custom_call.1} parent=27 // pred_check
          %p187 = pneg %p38
        $region30: #{tpu_custom_call.1} parent=27 // pred_check_branch
          %189 = sbr.rel (%p187) target = $region32
        $region31: #{tpu_custom_call.1} parent=27 // pred_region
          %s190 = sand.u32 %s28, 1
          %s191 = scalar_lea.sflag [#allocation3], %s190
          %s192 = sand.u32 %s28, 1
          %s193 = scalar_lea.vmem [#allocation2], %s192
          %s195 = ssub.s32 16, 16
          %196 = vsyncadd %s191, %s195
          %s197 = smul.addr %s18, 16
          %s198 = scalar_lea.hbm %s0, %s197
          %s200 = sshll.u32 %s193, 4
          %s201 = int_to_ptr.vmem [resolvable:$true] %s200
          %203 = dma.hbm_to_vmem [thread:$0]  %s198, 16, %s201, %s191
        $region32: #{tpu_custom_call.1} parent=27 // pred_fallthru
          _
      $region28: #{tpu_custom_call.1} parent=5 // pred_fallthru
        _
      %p204 = scmp.le.s32.totalorder 1, %s18
      %p205 = scmp.lt.s32.totalorder %s18, 3
      %p206 = pnand %p204, %p205
      %p207 = pneg %p206
      // Predicated region
      $region33: #{tpu_custom_call.1} parent=5 // pred_check
        _
      $region34: #{tpu_custom_call.1} parent=5 // pred_check_branch
        %209 = sbr.rel (%p206) target = $region36
      $region35: #{tpu_custom_call.1} parent=5 // pred_region
        %s210 = ssub.s32 %s18, 1
        %s211 = sand.u32 %s31, 1
        %s212 = scalar_lea.sflag [#allocation3], %s211
        %s213 = sand.u32 %s31, 1
        %s214 = scalar_lea.vmem [#allocation2], %s213
        // Predicated region
        $region37: #{tpu_custom_call.1} parent=35 // pred_check
          %p215 = pneg %p44
        $region38: #{tpu_custom_call.1} parent=35 // pred_check_branch
          %217 = sbr.rel (%p215) target = $region40
        $region39: #{tpu_custom_call.1} parent=35 // pred_region
          %218 = dma.done %s212, 16
        $region40: #{tpu_custom_call.1} parent=35 // pred_fallthru
          _
        // Predicated region
        $region41: #{tpu_custom_call.1} parent=35 // pred_check
          %p219 = pneg %p65
        $region42: #{tpu_custom_call.1} parent=35 // pred_check_branch
          %221 = sbr.rel (%p219) target = $region44
        $region43: #{tpu_custom_call.1} parent=35 // pred_region
          %222 = dma.done [#allocation6], 128
        $region44: #{tpu_custom_call.1} parent=35 // pred_fallthru
          _
        // Predicated region
        $region45: #{tpu_custom_call.1} parent=35 // pred_check
          %p223 = pneg %p86
        $region46: #{tpu_custom_call.1} parent=35 // pred_check_branch
          %225 = sbr.rel (%p223) target = $region48
        $region47: #{tpu_custom_call.1} parent=35 // pred_region
          %226 = dma.done [#allocation6], 128
        $region48: #{tpu_custom_call.1} parent=35 // pred_fallthru
          _
        // Predicated region
        $region49: #{tpu_custom_call.1} parent=35 // pred_check
          %p227 = pneg %p107
        $region50: #{tpu_custom_call.1} parent=35 // pred_check_branch
          %229 = sbr.rel (%p227) target = $region52
        $region51: #{tpu_custom_call.1} parent=35 // pred_region
          %230 = dma.done [#allocation9], 1024
        $region52: #{tpu_custom_call.1} parent=35 // pred_fallthru
          _
        %s231 = sand.u32 %s31, 1
        %s232 = scalar_lea.sflag [#allocation3], %s231
        %s233 = sand.u32 %s31, 1
        %s234 = scalar_lea.vmem [#allocation2], %s233
        %p235 = pneg %p44
        %p236 = pneg %p41
        %p237 = pneg %p65
        %p238 = pneg %p62
        %p239 = pneg %p86
        %p240 = pneg %p83
        %p241 = pneg %p107
        %p242 = pneg %p104
        %p243 = pneg %p133
        %p244 = pneg %p130
        %s245 = sand.u32 %s120, 1
        %s246 = scalar_lea.sflag [#allocation4], %s245
        %s247 = sand.u32 %s120, 1
        %s248 = smul.addr %s247, 8
        %s249 = scalar_lea.vmem [#allocation10], %s248
        %v250 = vld [vmem:[%s214] sm:$0x1]
        %v251 = vld [vmem:[#allocation5] sm:$0xff]
        %v252 = vld [vmem:[#allocation7] sm:$0xff]
        %v254 = vlaneseq
        %v255 = vshrl.u32 %v254, 7
        %v256 = vsub.s32 0, %v255
        %v257 = vrot.slane %v250, %v256
        %v259 = vmul.f32 %v251, %v257
        %v260 = vxor.u32 %v259, 2147483648
        %v261 = vmul.f32 %v260, 1.442695
        %v262 = vpow.pop %v261
        %v263 = vadd.f32 %v262, 1.0
        %v264 = vrcp.pop %v263
        %v265 = vmul.f32 1.0, %v264
        %v266 = vmul.f32 %v252, %v265
        %v267 = vsub.f32 1.0, %v252
        %v268 = vadd.f32 %v266, %v267
        %v269 = vmul.f32 %v268, %v257
        %v270 = vld [vmem:[#allocation8] sm:$0xff]
        %v271 = vld [vmem:[#allocation8 + $0x8] sm:$0xff]
        %v272 = vld [vmem:[#allocation8 + $0x10] sm:$0xff]
        %v273 = vld [vmem:[#allocation8 + $0x18] sm:$0xff]
        %v274 = vld [vmem:[#allocation8 + $0x20] sm:$0xff]
        %v275 = vld [vmem:[#allocation8 + $0x28] sm:$0xff]
        %v276 = vld [vmem:[#allocation8 + $0x30] sm:$0xff]
        %v277 = vld [vmem:[#allocation8 + $0x38] sm:$0xff]
        %vm278 = vcmask 523264
        %v280 = vsel %vm278, %v269, 0
        %282 = vmatprep.subr.mxu0 0.0
        %283 = vmatpush1.msra.mxu0 %v270
        %284 = vmatprep.subr.mxu0 0.0
        %285 = vmatpush1.msra.mxu0 %v271
        %286 = vmatprep.subr.mxu0 0.0
        %287 = vmatpush1.msra.mxu0 %v272
        %288 = vmatprep.subr.mxu0 0.0
        %289 = vmatpush1.msra.mxu0 %v273
        %290 = vmatprep.subr.mxu0 0.0
        %291 = vmatpush1.msra.mxu0 %v274
        %292 = vmatprep.subr.mxu0 0.0
        %293 = vmatpush1.msra.mxu0 %v275
        %294 = vmatprep.subr.mxu0 0.0
        %295 = vmatpush1.msra.mxu0 %v276
        %296 = vmatprep.subr.mxu0 0.0
        %297 = vmatpush1.msra.mxu0 %v277
        %298 = vmatprep.subr.mxu0 0.0
        %299 = vmatpush1.msra.mxu0 0.0
        %300 = vmatprep.subr.mxu0 0.0
        %301 = vmatpush1.msra.mxu0 0.0
        %302 = vmatprep.subr.mxu0 0.0
        %303 = vmatpush1.msra.mxu0 0.0
        %304 = vmatprep.subr.mxu0 0.0
        %305 = vmatpush1.msra.mxu0 0.0
        %306 = vmatprep.subr.mxu0 0.0
        %307 = vmatpush1.msra.mxu0 0.0
        %308 = vmatprep.subr.mxu0 0.0
        %309 = vmatpush1.msra.mxu0 0.0
        %310 = vmatprep.subr.mxu0 0.0
        %311 = vmatpush1.msra.mxu0 0.0
        %312 = vmatprep.subr.mxu0 0.0
        %313 = vmatpush1.msra.mxu0 0.0
        %314 = vmatprep.subr.mxu0 0.0
        %315 = vmatpush1.msra.mxu0 0.0
        %316 = vmatprep.subr.mxu0 0.0
        %317 = vmatpush1.msra.mxu0 0.0
        %318 = vmatprep.subr.mxu0 0.0
        %319 = vmatpush1.msra.mxu0 0.0
        %320 = vmatprep.subr.mxu0 0.0
        %321 = vmatpush1.msra.mxu0 0.0
        %322 = vmatprep.subr.mxu0 0.0
        %323 = vmatpush1.msra.mxu0 0.0
        %324 = vmatprep.subr.mxu0 0.0
        %325 = vmatpush1.msra.mxu0 0.0
        %326 = vmatprep.subr.mxu0 0.0
        %327 = vmatpush1.msra.mxu0 0.0
        %328 = vmatprep.subr.mxu0 0.0
        %329 = vmatpush1.msra.mxu0 0.0
        %330 = vmatprep.subr.mxu0 0.0
        %331 = vmatpush1.msra.mxu0 0.0
        %332 = vmatprep.subr.mxu0 0.0
        %333 = vmatpush1.msra.mxu0 0.0
        %334 = vmatprep.subr.mxu0 0.0
        %335 = vmatpush1.msra.mxu0 0.0
        %336 = vmatprep.subr.mxu0 0.0
        %337 = vmatpush1.msra.mxu0 0.0
        %338 = vmatprep.subr.mxu0 0.0
        %339 = vmatpush1.msra.mxu0 0.0
        %340 = vmatprep.subr.mxu0 0.0
        %341 = vmatpush1.msra.mxu0 0.0
        %342 = vmatprep.subr.mxu0 0.0
        %343 = vmatpush1.msra.mxu0 0.0
        %344 = vmatprep.subr.mxu0 0.0
        %345 = vmatpush1.msra.mxu0 0.0
        %346 = vmatprep.mubr.f32.mxu0 0.0
        %347 = vmatmul.mubr.f32.gmra.mrb[0].mxu0 %v280
        %v348 = vpop.f32.mrb[0].mxu0
        %v349 = vadd.f32 0.0, %v348
        %v350 = vpop.f32.mrb[0].mxu0
        %351 = vdwg.mxu0
        %352 = vst.msk [vmem:[%s249] sm:$0xff] %vm278, %v349
        %s353 = sand.u32 %s120, 1
        %s354 = scalar_lea.sflag [#allocation4], %s353
        %s355 = sand.u32 %s120, 1
        %s356 = smul.addr %s355, 8
        %s357 = scalar_lea.vmem [#allocation10], %s356
        // Predicated region
        $region53: #{tpu_custom_call.1} parent=35 // pred_check
          %p358 = pneg %p130
        $region54: #{tpu_custom_call.1} parent=35 // pred_check_branch
          %360 = sbr.rel (%p358) target = $region56
        $region55: #{tpu_custom_call.1} parent=35 // pred_region
          %s362 = ssub.s32 128, 128
          %363 = vsyncadd %s354, %s362
          %s364 = smul.addr %s23, 128
          %s365 = scalar_lea.hbm %s4, %s364
          %s367 = sshll.u32 %s357, 4
          %s368 = int_to_ptr.vmem [resolvable:$true] %s367
          %370 = dma.vmem_to_hbm [thread:$0]  %s368, 128, %s365, %s354
        $region56: #{tpu_custom_call.1} parent=35 // pred_fallthru
          _
      $region36: #{tpu_custom_call.1} parent=5 // pred_fallthru
        _
      %p371 = scmp.le.s32.totalorder 2, %s18
      // Predicated region
      $region57: #{tpu_custom_call.1} parent=5 // pred_check
        %p372 = pneg %p371
      $region58: #{tpu_custom_call.1} parent=5 // pred_check_branch
        %374 = sbr.rel (%p372) target = $region60
      $region59: #{tpu_custom_call.1} parent=5 // pred_region
        %s375 = ssub.s32 %s18, 2
        // Predicated region
        $region61: #{tpu_custom_call.1} parent=59 // pred_check
          %p376 = pneg %p136
        $region62: #{tpu_custom_call.1} parent=59 // pred_check_branch
          %378 = sbr.rel (%p376) target = $region64
        $region63: #{tpu_custom_call.1} parent=59 // pred_region
          %s379 = sand.u32 %s121, 1
          %s380 = scalar_lea.sflag [#allocation4], %s379
          %s381 = sand.u32 %s121, 1
          %s382 = smul.addr %s381, 8
          %s383 = scalar_lea.vmem [#allocation10], %s382
          %384 = dma.done %s380, 128
        $region64: #{tpu_custom_call.1} parent=59 // pred_fallthru
          _
      $region60: #{tpu_custom_call.1} parent=5 // pred_fallthru
        _
    $region6: #{tpu_custom_call.1} parent=1 // loop_footer
      %s22 = sadd.s32 1, %s18
    $region7: #{tpu_custom_call.1} parent=1 // loop_footer_branch
      %17 = sbr.rel target = $region3
    $region8: #{tpu_custom_call.1} parent=1 // loop_exit
      _
    %385 = vsyncpa [#allocation3], 1
    %s386 = scalar_lea.sflag [#allocation3], 1
    %387 = vsyncpa %s386, 1
    %388 = vsyncpa [#allocation6], 1
    %389 = vsyncpa [#allocation9], 1
    %390 = vsyncpa [#allocation4], 1
    %s391 = scalar_lea.sflag [#allocation4], 1
    %392 = vsyncpa %s391, 1

</llo_original>
